<compile_context>
chip_gen: v7x
topology: tpu7x:2x2x1
jax: 0.10.0
libtpu: 0.0.40
codegen_flags: <defaults>
</compile_context>

<pallas_src>
import jax
import jax.numpy as jnp
from jax.experimental import pallas as pl
from jax.experimental.pallas import tpu as pltpu

IN_F = 375
HID_F = 25
OUT_F = 15

# Max batch tile. Double-buffered x at 8192 rows is ~23.4 MiB; we size
# vmem_limit_bytes explicitly so this works on v5e (16 MiB default scoped)
# as well as v6e/v7x (32 MiB default scoped; 128/64 MiB physical).
_TB_MAX = 8192
_MIN_GRID_STEPS = 4  # keep >= 4 grid steps when possible (v7x 2-TC split)


def _cdiv(a, b):
    return (a + b - 1) // b


def _round_up(x, m):
    return ((x + m - 1) // m) * m


def _fused_mlp_kernel(x_ref, w_ref, b_ref, o_ref):
    # x_ref : [TB, 375]   w_ref : [375, 15]   b_ref : [1, 15]   o_ref : [TB, 15]
    y = jnp.dot(x_ref[...], w_ref[...], preferred_element_type=jnp.float32)
    o_ref[...] = (y + b_ref[...]).astype(o_ref.dtype)


def _batch_tile(batch):
    """Batch tile: multiple of 8, capped for VMEM, >= _MIN_GRID_STEPS steps."""
    tb = _round_up(_cdiv(max(batch, 1), _MIN_GRID_STEPS), 8)
    return max(8, min(_TB_MAX, tb))


def make_linear_projection_sbp(w1, b1, w2, b2):
    """Build the fused forward fn once (weight fusion hoisted out of the call path).

    w1: [25, 375], b1: [25], w2: [15, 25], b2: [15]  (PyTorch layout).
    Returns forward(feature: [..., 375]) -> [..., 15], same math as
    linear2(linear1(feature)).
    """
    w_comb = jnp.dot(w1.T, w2.T).astype(jnp.float32)                      # [375, 15]
    b_comb = (jnp.dot(b1, w2.T) + b2).astype(jnp.float32).reshape(1, OUT_F)

    @jax.jit
    def forward(feature):
        orig_shape = feature.shape
        assert orig_shape[-1] == IN_F
        x = feature.reshape(-1, IN_F).astype(jnp.float32)
        B = x.shape[0]

        tb = _batch_tile(B)
        grid = (_cdiv(B, tb),)  # no padding: Pallas pads edge reads, masks edge writes

        # Size scoped VMEM to actual use + headroom (double-buffered x/out,
        # resident weight/bias); clamp well under v7x's 64 MiB physical.
        vmem_bytes = (2 * tb * IN_F * 4
                      + 2 * tb * OUT_F * 4
                      + 2 * (IN_F * OUT_F + OUT_F) * 4
                      + (4 << 20))
        vmem_limit = int(min(max(vmem_bytes, 16 << 20), 48 << 20))

        cost = pl.CostEstimate(
            flops=2 * B * IN_F * OUT_F,
            transcendentals=0,
            bytes_accessed=B * (IN_F + OUT_F) * 4 + (IN_F * OUT_F + OUT_F) * 4,
        )

        out = pl.pallas_call(
            _fused_mlp_kernel,
            out_shape=jax.ShapeDtypeStruct((B, OUT_F), jnp.float32),
            grid_spec=pl.GridSpec(
                grid=grid,
                in_specs=[
                    pl.BlockSpec((tb, IN_F), lambda i: (i, 0)),      # stream x tiles
                    pl.BlockSpec((IN_F, OUT_F), lambda i: (0, 0)),   # resident weight
                    pl.BlockSpec((1, OUT_F), lambda i: (0, 0)),      # resident bias
                ],
                out_specs=pl.BlockSpec((tb, OUT_F), lambda i: (i, 0)),
            ),
            compiler_params=pltpu.CompilerParams(
                dimension_semantics=("parallel",),
                vmem_limit_bytes=vmem_limit,
            ),
            cost_estimate=cost,
        )(x, w_comb, b_comb)

        return out.reshape(orig_shape[:-1] + (OUT_F,))

    return forward


def _init_params(key):
    """Deterministic init mimicking nn.Linear default (uniform +/- 1/sqrt(fan_in))."""
    k1, k2, k3, k4 = jax.random.split(key, 4)
    bound1 = 1.0 / (IN_F ** 0.5)
    bound2 = 1.0 / (HID_F ** 0.5)
    w1 = jax.random.uniform(k1, (HID_F, IN_F), jnp.float32, -bound1, bound1)
    b1 = jax.random.uniform(k2, (HID_F,), jnp.float32, -bound1, bound1)
    w2 = jax.random.uniform(k3, (OUT_F, HID_F), jnp.float32, -bound2, bound2)
    b2 = jax.random.uniform(k4, (OUT_F,), jnp.float32, -bound2, bound2)
    return w1, b1, w2, b2


def _ref(feature, w1, b1, w2, b2):
    # Two-step pure-JAX reference (same math as the PyTorch module).
    return (feature @ w1.T + b1) @ w2.T + b2


if __name__ == "__main__":
    key = jax.random.PRNGKey(0)
    pkey, xkey1, xkey2 = jax.random.split(key, 3)
    w1, b1, w2, b2 = _init_params(pkey)

    forward = make_linear_projection_sbp(w1, b1, w2, b2)

    # Small case (single tile): batch=8, feature dim 375.
    feat_small = jax.random.normal(xkey1, (8, IN_F), jnp.float32)
    out_small = jax.block_until_ready(forward(feat_small))
    ref_small = _ref(feat_small, w1, b1, w2, b2)
    assert out_small.shape == (8, OUT_F)
    assert jnp.allclose(out_small, ref_small, atol=1e-4, rtol=1e-4)

    # Multi-tile case with a partial trailing block (no wrapper padding).
    feat_big = jax.random.normal(xkey2, (1030, IN_F), jnp.float32)
    out_big = jax.block_until_ready(forward(feat_big))
    ref_big = _ref(feat_big, w1, b1, w2, b2)
    assert out_big.shape == (1030, OUT_F)
    assert jnp.allclose(out_big, ref_big, atol=1e-4, rtol=1e-4)

    print("KERNEL_OK")
</pallas_src>

<mosaic_0001>
module attributes {stable_mosaic.version = 11 : i64} {
  func.func @_fused_mlp_kernel(%arg0: i32, %arg1: memref<8x375xf32, #tpu.memory_space<vmem>>, %arg2: memref<375x15xf32, #tpu.memory_space<vmem>>, %arg3: memref<1x15xf32, #tpu.memory_space<vmem>>, %arg4: memref<8x15xf32, #tpu.memory_space<vmem>>) attributes {dimension_semantics = [#tpu.dimension_semantics<parallel>], iteration_bounds = array<i64: 1>, scalar_prefetch = 0 : i64, scratch_operands = 0 : i64, tpu.core_type = #tpu.core_type<tc>, window_params = [{transform_indices = @transform_0, window_bounds = array<i64: 8, 375>}, {pipeline_mode = #tpu.pipeline_mode<synchronous>, transform_indices = @transform_1, window_bounds = array<i64: 375, 15>}, {pipeline_mode = #tpu.pipeline_mode<synchronous>, transform_indices = @transform_2, window_bounds = array<i64: 1, 15>}, {transform_indices = @transform_3, window_bounds = array<i64: 8, 15>}]} {
    %c0 = arith.constant 0 : index
    %c0_0 = arith.constant 0 : index
    %0 = vector.load %arg1[%c0, %c0_0] : memref<8x375xf32, #tpu.memory_space<vmem>>, vector<8x375xf32>
    %c0_1 = arith.constant 0 : index
    %c0_2 = arith.constant 0 : index
    %1 = vector.load %arg2[%c0_1, %c0_2] : memref<375x15xf32, #tpu.memory_space<vmem>>, vector<375x15xf32>
    %cst = arith.constant dense<0.000000e+00> : vector<8x15xf32>
    %2 = tpu.matmul %0, %1, %cst {dimension_numbers = #tpu.dot_dimension_numbers<[1], [0], [0], [1], [0, 0, 1, 1], [], []>} : vector<8x375xf32>, vector<375x15xf32>, vector<8x15xf32> -> vector<8x15xf32>
    %c0_3 = arith.constant 0 : index
    %c0_4 = arith.constant 0 : index
    %3 = vector.load %arg3[%c0_3, %c0_4] : memref<1x15xf32, #tpu.memory_space<vmem>>, vector<1x15xf32>
    %4 = vector.broadcast %3 : vector<1x15xf32> to vector<8x15xf32>
    %5 = arith.addf %2, %4 : vector<8x15xf32>
    %c0_5 = arith.constant 0 : index
    %c0_6 = arith.constant 0 : index
    %6 = vector.load %arg4[%c0_5, %c0_6] : memref<8x15xf32, #tpu.memory_space<vmem>>, vector<8x15xf32>
    tpu.vector_store %arg4[%c0_5, %c0_6], %5 {strides = array<i32>} : memref<8x15xf32, #tpu.memory_space<vmem>>, vector<8x15xf32>,
    return
  }
  func.func @transform_0(%arg0: i32) -> (i32, i32) {
    %c0_i32 = arith.constant 0 : i32
    %c0_i32_0 = arith.constant 0 : i32
    return %arg0, %c0_i32 : i32, i32
  }
  func.func @transform_1(%arg0: i32) -> (i32, i32) {
    %c0_i32 = arith.constant 0 : i32
    %c0_i32_0 = arith.constant 0 : i32
    %c0_i32_1 = arith.constant 0 : i32
    return %c0_i32, %c0_i32_0 : i32, i32
  }
  func.func @transform_2(%arg0: i32) -> (i32, i32) {
    %c0_i32 = arith.constant 0 : i32
    %c0_i32_0 = arith.constant 0 : i32
    %c0_i32_1 = arith.constant 0 : i32
    return %c0_i32, %c0_i32_0 : i32, i32
  }
  func.func @transform_3(%arg0: i32) -> (i32, i32) {
    %c0_i32 = arith.constant 0 : i32
    %c0_i32_0 = arith.constant 0 : i32
    return %arg0, %c0_i32 : i32, i32
  }
}

</mosaic_0001>

<llo_original>
// kernel: forward.1
$region0: #{forward.1}
  #allocation0 [shape = 'u32[]', space=smem, size = 0x4, offset = 0x4, fixed_abs, tag = 'smem constant byte address 0x4 - core index']
  #allocation1 [shape = 'u32[144,128]{1,0:T(1,128)}', space=vmem, size = 0x12000, scoped, tag = 'internal scratch']
  %s0 = inlined_call_operand.hbm [shape: f32[8,375], index: 0, kind: input, shape index: {}]
  %s1 = inlined_call_operand.hbm [shape: f32[375,15], index: 1, kind: input, shape index: {}]
  %s2 = inlined_call_operand.vmem [shape: f32[1,15], index: 2, kind: input, shape index: {}]
  %s3 = inlined_call_operand.hbm [shape: f32[8,15], index: 3, kind: output, shape index: {}]
  %s4 = sld [smem:[#allocation0]]
  $region30: #{forward.1} parent=0
    _
  %s6 = ssub.s32 1, %s4
  %s7 = scalar_select 0, %s6, %s4
  $region1: #{forward.1} parent=0
    #allocation2 [shape = 'u8[12288]{0}', space=vmem, size = 0x3000, scoped, tag = 'input window, operand 0, single buffered']
    #allocation3 [shape = 's32[1]{0}', space=sflag, size = 0x4, scoped, tag = 'scoped memory for forward.1']
    #allocation4 [shape = 's32[1]{0}', space=sflag, size = 0x4, scoped, tag = 'scoped memory for forward.1']
    #allocation5 [shape = 'u8[192512]{0}', space=vmem, size = 0x2f000, scoped, tag = 'input window, operand 1, single buffered']
    #allocation6 [shape = 's32[1]{0}', space=sflag, size = 0x4, scoped, tag = 'scoped memory for forward.1']
    #allocation7 [shape = 'u8[4096]{0}', space=vmem, size = 0x1000, scoped, tag = 'output window, operand 0, single buffered']
    %8 = vsyncpa [#allocation3], 0
    %9 = vsyncpa [#allocation6], 0
    %10 = vsyncpa [#allocation4], 0
    // Predicated region
    $region2: #{forward.1} parent=1 // pred_check
      _
    $region3: #{forward.1} parent=1 // pred_check_branch
      %12 = sbr.rel (0) target = $region5
    $region4: #{forward.1} parent=1 // pred_region
      %s14 = ssub.s32 384, 384
      %15 = vsyncadd [#allocation3], %s14
      %s17 = sshll.u32 [#allocation2], 4
      %s18 = int_to_ptr.vmem [resolvable:$true] %s17
      %20 = dma.hbm_to_vmem [thread:$0]  %s0, 384, %s18, [#allocation3]
    $region5: #{forward.1} parent=1 // pred_fallthru
      _
    // Predicated region
    $region6: #{forward.1} parent=1 // pred_check
      _
    $region7: #{forward.1} parent=1 // pred_check_branch
      %22 = sbr.rel (0) target = $region9
    $region8: #{forward.1} parent=1 // pred_region
      %s24 = ssub.s32 6016, 6016
      %25 = vsyncadd [#allocation6], %s24
      %s26 = sshll.u32 [#allocation5], 4
      %s27 = int_to_ptr.vmem [resolvable:$true] %s26
      %32 = dma.hbm_to_vmem [thread:$0]  %s1, 6016, %s27, [#allocation6], 128, 128, 8
    $region9: #{forward.1} parent=1 // pred_fallthru
      _
    // Predicated region
    $region10: #{forward.1} parent=1 // pred_check
      _
    $region11: #{forward.1} parent=1 // pred_check_branch
      %34 = sbr.rel (0) target = $region13
    $region12: #{forward.1} parent=1 // pred_region
      _
    $region13: #{forward.1} parent=1 // pred_fallthru
      _
    // Predicated region
    $region14: #{forward.1} parent=1 // pred_check
      _
    $region15: #{forward.1} parent=1 // pred_check_branch
      %36 = sbr.rel (0) target = $region17
    $region16: #{forward.1} parent=1 // pred_region
      %37 = dma.done [#allocation3], 384
    $region17: #{forward.1} parent=1 // pred_fallthru
      _
    // Predicated region
    $region18: #{forward.1} parent=1 // pred_check
      _
    $region19: #{forward.1} parent=1 // pred_check_branch
      %39 = sbr.rel (0) target = $region21
    $region20: #{forward.1} parent=1 // pred_region
      %40 = dma.done [#allocation6], 6016
    $region21: #{forward.1} parent=1 // pred_fallthru
      _
    %v41 = vld [vmem:[#allocation2] sm:$0xff]
    %v42 = vld [vmem:[#allocation2 + $0x8] sm:$0xff]
    %v43 = vld [vmem:[#allocation2 + $0x10] sm:$0xff]
    %v44 = vld [vmem:[#allocation5] sm:$0xff]
    %v45 = vld [vmem:[#allocation5 + $0x8] sm:$0xff]
    %v46 = vld [vmem:[#allocation5 + $0x10] sm:$0xff]
    %v47 = vld [vmem:[#allocation5 + $0x18] sm:$0xff]
    %v48 = vld [vmem:[#allocation5 + $0x20] sm:$0xff]
    %v49 = vld [vmem:[#allocation5 + $0x28] sm:$0xff]
    %v50 = vld [vmem:[#allocation5 + $0x30] sm:$0xff]
    %v51 = vld [vmem:[#allocation5 + $0x38] sm:$0xff]
    %v52 = vld [vmem:[#allocation5 + $0x40] sm:$0xff]
    %v53 = vld [vmem:[#allocation5 + $0x48] sm:$0xff]
    %v54 = vld [vmem:[#allocation5 + $0x50] sm:$0xff]
    %v55 = vld [vmem:[#allocation5 + $0x58] sm:$0xff]
    %v56 = vld [vmem:[#allocation5 + $0x60] sm:$0xff]
    %v57 = vld [vmem:[#allocation5 + $0x68] sm:$0xff]
    %v58 = vld [vmem:[#allocation5 + $0x70] sm:$0xff]
    %v59 = vld [vmem:[#allocation5 + $0x78] sm:$0xff]
    %v60 = vld [vmem:[#allocation5 + $0x80] sm:$0xff]
    %v61 = vld [vmem:[#allocation5 + $0x88] sm:$0xff]
    %v62 = vld [vmem:[#allocation5 + $0x90] sm:$0xff]
    %v63 = vld [vmem:[#allocation5 + $0x98] sm:$0xff]
    %v64 = vld [vmem:[#allocation5 + $0xa0] sm:$0xff]
    %v65 = vld [vmem:[#allocation5 + $0xa8] sm:$0xff]
    %v66 = vld [vmem:[#allocation5 + $0xb0] sm:$0xff]
    %v67 = vld [vmem:[#allocation5 + $0xb8] sm:$0xff]
    %v68 = vld [vmem:[#allocation5 + $0xc0] sm:$0xff]
    %v69 = vld [vmem:[#allocation5 + $0xc8] sm:$0xff]
    %v70 = vld [vmem:[#allocation5 + $0xd0] sm:$0xff]
    %v71 = vld [vmem:[#allocation5 + $0xd8] sm:$0xff]
    %v72 = vld [vmem:[#allocation5 + $0xe0] sm:$0xff]
    %v73 = vld [vmem:[#allocation5 + $0xe8] sm:$0xff]
    %v74 = vld [vmem:[#allocation5 + $0xf0] sm:$0xff]
    %v75 = vld [vmem:[#allocation5 + $0xf8] sm:$0xff]
    %v76 = vld [vmem:[#allocation5 + $0x100] sm:$0xff]
    %v77 = vld [vmem:[#allocation5 + $0x108] sm:$0xff]
    %v78 = vld [vmem:[#allocation5 + $0x110] sm:$0xff]
    %v79 = vld [vmem:[#allocation5 + $0x118] sm:$0xff]
    %v80 = vld [vmem:[#allocation5 + $0x120] sm:$0xff]
    %v81 = vld [vmem:[#allocation5 + $0x128] sm:$0xff]
    %v82 = vld [vmem:[#allocation5 + $0x130] sm:$0xff]
    %v83 = vld [vmem:[#allocation5 + $0x138] sm:$0xff]
    %v84 = vld [vmem:[#allocation5 + $0x140] sm:$0xff]
    %v85 = vld [vmem:[#allocation5 + $0x148] sm:$0xff]
    %v86 = vld [vmem:[#allocation5 + $0x150] sm:$0xff]
    %v87 = vld [vmem:[#allocation5 + $0x158] sm:$0xff]
    %v88 = vld [vmem:[#allocation5 + $0x160] sm:$0xff]
    %v89 = vld [vmem:[#allocation5 + $0x168] sm:$0xff]
    %v90 = vld [vmem:[#allocation5 + $0x170] sm:$0x7f]
    %v91 = vld [vmem:[%s2] sm:$0x1]
    %v93 = vlaneseq
    %v94 = vshrl.u32 %v93, 7
    %v95 = vsub.s32 0, %v94
    %v96 = vrot.slane %v91, %v95
    %vm98 = vcmask 973824
    %v100 = vsel %vm98, %v43, 0
    %vm102 = vcmask 1046528
    %v104 = vsel %vm102, %v90, 0
    %106 = vmatprep.subr.mxu0 0.0
    %107 = vmatpush1.msra.mxu0 %v44
    %108 = vmatprep.subr.mxu0 0.0
    %109 = vmatpush1.msra.mxu0 %v45
    %110 = vmatprep.subr.mxu0 0.0
    %111 = vmatpush1.msra.mxu0 %v46
    %112 = vmatprep.subr.mxu0 0.0
    %113 = vmatpush1.msra.mxu0 %v47
    %114 = vmatprep.subr.mxu0 0.0
    %115 = vmatpush1.msra.mxu0 %v48
    %116 = vmatprep.subr.mxu0 0.0
    %117 = vmatpush1.msra.mxu0 %v49
    %118 = vmatprep.subr.mxu0 0.0
    %119 = vmatpush1.msra.mxu0 %v50
    %120 = vmatprep.subr.mxu0 0.0
    %121 = vmatpush1.msra.mxu0 %v51
    %122 = vmatprep.subr.mxu0 0.0
    %123 = vmatpush1.msra.mxu0 %v52
    %124 = vmatprep.subr.mxu0 0.0
    %125 = vmatpush1.msra.mxu0 %v53
    %126 = vmatprep.subr.mxu0 0.0
    %127 = vmatpush1.msra.mxu0 %v54
    %128 = vmatprep.subr.mxu0 0.0
    %129 = vmatpush1.msra.mxu0 %v55
    %130 = vmatprep.subr.mxu0 0.0
    %131 = vmatpush1.msra.mxu0 %v56
    %132 = vmatprep.subr.mxu0 0.0
    %133 = vmatpush1.msra.mxu0 %v57
    %134 = vmatprep.subr.mxu0 0.0
    %135 = vmatpush1.msra.mxu0 %v58
    %136 = vmatprep.subr.mxu0 0.0
    %137 = vmatpush1.msra.mxu0 %v59
    %138 = vmatprep.subr.mxu0 0.0
    %139 = vmatpush1.msra.mxu0 %v60
    %140 = vmatprep.subr.mxu0 0.0
    %141 = vmatpush1.msra.mxu0 %v61
    %142 = vmatprep.subr.mxu0 0.0
    %143 = vmatpush1.msra.mxu0 %v62
    %144 = vmatprep.subr.mxu0 0.0
    %145 = vmatpush1.msra.mxu0 %v63
    %146 = vmatprep.subr.mxu0 0.0
    %147 = vmatpush1.msra.mxu0 %v64
    %148 = vmatprep.subr.mxu0 0.0
    %149 = vmatpush1.msra.mxu0 %v65
    %150 = vmatprep.subr.mxu0 0.0
    %151 = vmatpush1.msra.mxu0 %v66
    %152 = vmatprep.subr.mxu0 0.0
    %153 = vmatpush1.msra.mxu0 %v67
    %154 = vmatprep.subr.mxu0 0.0
    %155 = vmatpush1.msra.mxu0 %v68
    %156 = vmatprep.subr.mxu0 0.0
    %157 = vmatpush1.msra.mxu0 %v69
    %158 = vmatprep.subr.mxu0 0.0
    %159 = vmatpush1.msra.mxu0 %v70
    %160 = vmatprep.subr.mxu0 0.0
    %161 = vmatpush1.msra.mxu0 %v71
    %162 = vmatprep.subr.mxu0 0.0
    %163 = vmatpush1.msra.mxu0 %v72
    %164 = vmatprep.subr.mxu0 0.0
    %165 = vmatpush1.msra.mxu0 %v73
    %166 = vmatprep.subr.mxu0 0.0
    %167 = vmatpush1.msra.mxu0 %v74
    %168 = vmatprep.subr.mxu0 0.0
    %169 = vmatpush1.msra.mxu0 %v75
    %170 = vmatprep.mubr.f32.mxu0 %v42
    %171 = vmatmul.mubr.f32.gmra.mrb[0].mxu0 %v41
    %v172 = vpop.f32.mrb[0].mxu0
    %v173 = vadd.f32 %v96, %v172
    %v174 = vpop.f32.mrb[0].mxu0
    %175 = vdwg.mxu0
    %176 = vmatprep.subr.mxu0 0.0
    %177 = vmatpush1.msra.mxu0 %v76
    %178 = vmatprep.subr.mxu0 0.0
    %179 = vmatpush1.msra.mxu0 %v77
    %180 = vmatprep.subr.mxu0 0.0
    %181 = vmatpush1.msra.mxu0 %v78
    %182 = vmatprep.subr.mxu0 0.0
    %183 = vmatpush1.msra.mxu0 %v79
    %184 = vmatprep.subr.mxu0 0.0
    %185 = vmatpush1.msra.mxu0 %v80
    %186 = vmatprep.subr.mxu0 0.0
    %187 = vmatpush1.msra.mxu0 %v81
    %188 = vmatprep.subr.mxu0 0.0
    %189 = vmatpush1.msra.mxu0 %v82
    %190 = vmatprep.subr.mxu0 0.0
    %191 = vmatpush1.msra.mxu0 %v83
    %192 = vmatprep.subr.mxu0 0.0
    %193 = vmatpush1.msra.mxu0 %v84
    %194 = vmatprep.subr.mxu0 0.0
    %195 = vmatpush1.msra.mxu0 %v85
    %196 = vmatprep.subr.mxu0 0.0
    %197 = vmatpush1.msra.mxu0 %v86
    %198 = vmatprep.subr.mxu0 0.0
    %199 = vmatpush1.msra.mxu0 %v87
    %200 = vmatprep.subr.mxu0 0.0
    %201 = vmatpush1.msra.mxu0 %v88
    %202 = vmatprep.subr.mxu0 0.0
    %203 = vmatpush1.msra.mxu0 %v89
    %204 = vmatprep.subr.mxu0 0.0
    %205 = vmatpush1.msra.mxu0 %v104
    %206 = vmatprep.subr.mxu0 0.0
    %207 = vmatpush1.msra.mxu0 0.0
    %208 = vmatprep.subr.mxu0 0.0
    %209 = vmatpush1.msra.mxu0 0.0
    %210 = vmatprep.subr.mxu0 0.0
    %211 = vmatpush1.msra.mxu0 0.0
    %212 = vmatprep.subr.mxu0 0.0
    %213 = vmatpush1.msra.mxu0 0.0
    %214 = vmatprep.subr.mxu0 0.0
    %215 = vmatpush1.msra.mxu0 0.0
    %216 = vmatprep.subr.mxu0 0.0
    %217 = vmatpush1.msra.mxu0 0.0
    %218 = vmatprep.subr.mxu0 0.0
    %219 = vmatpush1.msra.mxu0 0.0
    %220 = vmatprep.subr.mxu0 0.0
    %221 = vmatpush1.msra.mxu0 0.0
    %222 = vmatprep.subr.mxu0 0.0
    %223 = vmatpush1.msra.mxu0 0.0
    %224 = vmatprep.subr.mxu0 0.0
    %225 = vmatpush1.msra.mxu0 0.0
    %226 = vmatprep.subr.mxu0 0.0
    %227 = vmatpush1.msra.mxu0 0.0
    %228 = vmatprep.subr.mxu0 0.0
    %229 = vmatpush1.msra.mxu0 0.0
    %230 = vmatprep.subr.mxu0 0.0
    %231 = vmatpush1.msra.mxu0 0.0
    %232 = vmatprep.subr.mxu0 0.0
    %233 = vmatpush1.msra.mxu0 0.0
    %234 = vmatprep.subr.mxu0 0.0
    %235 = vmatpush1.msra.mxu0 0.0
    %236 = vmatprep.subr.mxu0 0.0
    %237 = vmatpush1.msra.mxu0 0.0
    %238 = vmatprep.subr.mxu0 0.0
    %239 = vmatpush1.msra.mxu0 0.0
    %240 = vmatprep.mubr.f32.mxu0 0.0
    %241 = vmatmul.mubr.f32.gmra.mrb[0].mxu0 %v100
    %v242 = vpop.f32.mrb[0].mxu0
    %v243 = vadd.f32 %v173, %v242
    %v244 = vpop.f32.mrb[0].mxu0
    %245 = vdwg.mxu0
    %vm246 = vcmask 121856
    %247 = vst.msk [vmem:[#allocation7] sm:$0xff] %vm246, %v243
    // Predicated region
    $region22: #{forward.1} parent=1 // pred_check
      _
    $region23: #{forward.1} parent=1 // pred_check_branch
      %249 = sbr.rel (0) target = $region25
    $region24: #{forward.1} parent=1 // pred_region
      %s251 = ssub.s32 128, 128
      %252 = vsyncadd [#allocation4], %s251
      %s254 = sshll.u32 [#allocation7], 4
      %s255 = int_to_ptr.vmem [resolvable:$true] %s254
      %257 = dma.vmem_to_hbm [thread:$0]  %s255, 128, %s3, [#allocation4]
    $region25: #{forward.1} parent=1 // pred_fallthru
      _
    // Predicated region
    $region26: #{forward.1} parent=1 // pred_check
      _
    $region27: #{forward.1} parent=1 // pred_check_branch
      %259 = sbr.rel (0) target = $region29
    $region28: #{forward.1} parent=1 // pred_region
      %260 = dma.done [#allocation4], 128
    $region29: #{forward.1} parent=1 // pred_fallthru
      _
    %261 = vsyncpa [#allocation3], 1
    %262 = vsyncpa [#allocation6], 1
    %263 = vsyncpa [#allocation4], 1

</llo_original>
